<compile_context>
chip_gen: v7x
topology: tpu7x:2x2x1
jax: 0.10.0
libtpu: 0.0.40
codegen_flags: <defaults>
</compile_context>

<pallas_src>
import functools
import math

import jax
import jax.numpy as jnp
from jax import lax
from jax.experimental import pallas as pl
from jax.experimental.pallas import tpu as pltpu

MARGIN = 2.0
PAIRWISE_EPS = 1e-6  # torch F.pairwise_distance default eps


def _round_up(x, m):
    return (x + m - 1) // m * m


def _contrastive_loss_kernel(*refs, fold, margin, bf_total, tbf, ragged):
    """One grid step = one tile of `tbf` folded rows -> one (1, 8, 128) partial sum.

    refs (fold > 1):  group_ref (W, fold), x1_ref/x2_ref (tbf, W), lbl_ref (tbf, fold),
                      out_ref (1, 8, 128)
    refs (fold == 1): x1_ref/x2_ref (tbf, D), lbl_ref (tbf, 1), out_ref (1, 8, 128)
    """
    if fold > 1:
        group_ref, x1_ref, x2_ref, lbl_ref, out_ref = refs
    else:
        x1_ref, x2_ref, lbl_ref, out_ref = refs
        group_ref = None

    step = pl.program_id(0)

    # Keep all arithmetic in f32 even when the HBM transport dtype is bf16.
    x1 = x1_ref[...].astype(jnp.float32)
    x2 = x2_ref[...].astype(jnp.float32)
    diff = (x1 - x2) + PAIRWISE_EPS
    sq = diff * diff                                           # (tbf, W)

    if fold > 1:
        # Folded layout: lanes [j*D, (j+1)*D) of folded row r belong to original row
        # r*fold + j. Recover per-row sums with an MXU mat-vec against the constant
        # block-diagonal grouping matrix (hoisted to the wrapper, VMEM resident).
        d2 = jnp.dot(sq, group_ref[...], preferred_element_type=jnp.float32)  # (tbf, fold)
    else:
        d2 = jnp.sum(sq, axis=-1, keepdims=True)               # (tbf, 1)

    dist = jnp.sqrt(d2)
    lbl = lbl_ref[...]                                         # (tbf, fold) f32
    hinge = jnp.maximum(margin - dist, 0.0)
    # Positive term uses d2 directly (== dist**2): one fewer multiply, no sqrt round-trip.
    per_row = lbl * d2 + (1.0 - lbl) * (hinge * hinge)

    def _write_partial(vals):
        # Full-width (8, 128) unmasked store of this tile's partial sum.
        out_ref[...] = jnp.full(out_ref.shape, jnp.sum(vals), dtype=jnp.float32)

    if ragged:
        # The last tile overhangs the true batch; the overhang rows contain unspecified
        # data from the boundary DMA. Zero their contribution; only the final grid step
        # pays for the mask thanks to the pl.when gating.
        last = pl.num_programs(0) - 1

        @pl.when(step != last)
        def _():
            _write_partial(per_row)

        @pl.when(step == last)
        def _():
            r = lax.broadcasted_iota(jnp.int32, per_row.shape, 0)
            valid = (step * tbf + r) < bf_total
            _write_partial(jnp.where(valid, per_row, 0.0))
    else:
        _write_partial(per_row)


def contrastive_loss(output_1, output_2, label, margin=MARGIN, tile_rows=None):
    """output_1, output_2: (B, D); label: (B,). Returns scalar f32 loss."""
    output_1 = jnp.asarray(output_1)
    output_2 = jnp.asarray(output_2)
    # Ship bf16 inputs as bf16 (half the HBM bytes on a mem-bound kernel); otherwise f32.
    if output_1.dtype == jnp.bfloat16 and output_2.dtype == jnp.bfloat16:
        in_dtype = jnp.bfloat16
    else:
        in_dtype = jnp.float32
    x1 = output_1.astype(in_dtype)
    x2 = output_2.astype(in_dtype)
    lbl = jnp.asarray(label, jnp.float32).reshape(-1)

    B, D = x1.shape

    # Lane-folding: pack `fold` consecutive rows into one 128-lane row (free row-major
    # reshape, no copy) when D divides 128 and fold divides B. No padding is ever added.
    if D < 128 and 128 % D == 0:
        fold = math.gcd(128 // D, B)
    else:
        fold = 1
    W = fold * D
    Bf = B // fold                                   # exact by construction

    if fold > 1:
        x1 = x1.reshape(Bf, W)
        x2 = x2.reshape(Bf, W)
        lblf = lbl.reshape(Bf, fold)
        lbl_w = fold
    else:
        lblf = lbl.reshape(Bf, 1)
        lbl_w = 1

    # Tile size: ~512 KiB per (lane-padded, f32-equivalent) input block. Small enough
    # that blocks + double buffers + in-kernel f32 temporaries stay far below the 32 MiB
    # scoped VMEM limit (v7x has only 64 MiB physical), big enough for ~85% of the HBM
    # roofline.
    w_pad = _round_up(W, 128)
    if tile_rows is None:
        tbf = (512 * 1024) // (w_pad * 4)
    else:
        tbf = max(1, int(tile_rows) // fold)
    tbf = max(8, (tbf // 8) * 8)
    if tbf >= Bf:
        tbf = Bf                                     # single full-extent tile
    num_tiles = -(-Bf // tbf)
    ragged = (Bf % tbf) != 0                         # static: mask only if needed

    kernel = functools.partial(
        _contrastive_loss_kernel,
        fold=fold, margin=float(margin), bf_total=Bf, tbf=tbf, ragged=ragged)

    in_arrays = []
    in_specs = []
    if fold > 1:
        # Constant block-diagonal grouping matrix, hoisted out of the grid loop.
        group = jnp.repeat(jnp.eye(fold, dtype=jnp.float32), D, axis=0)   # (W, fold)
        in_arrays.append(group)
        in_specs.append(pl.BlockSpec((W, fold), lambda i: (0, 0)))
    in_arrays += [x1, x2, lblf]
    in_specs += [
        pl.BlockSpec((tbf, W), lambda i: (i, 0)),
        pl.BlockSpec((tbf, W), lambda i: (i, 0)),
        pl.BlockSpec((tbf, lbl_w), lambda i: (i, 0)),
    ]

    partials = pl.pallas_call(
        kernel,
        out_shape=jax.ShapeDtypeStruct((num_tiles, 8, 128), jnp.float32),
        grid_spec=pltpu.PrefetchScalarGridSpec(
            num_scalar_prefetch=0,
            grid=(num_tiles,),
            in_specs=in_specs,
            out_specs=pl.BlockSpec((1, 8, 128), lambda i: (i, 0, 0)),
        ),
        compiler_params=pltpu.CompilerParams(
            dimension_semantics=("parallel",),       # per-tile independent outputs
            vmem_limit_bytes=32 * 1024 * 1024,
        ),
    )(*in_arrays)

    # Tiny wrapper-side reduction over per-tile partial sums, then the mean.
    return jnp.sum(partials[:, 0, 0]) / B


def _reference(output_1, output_2, label, margin=MARGIN):
    # Pure-JAX reference mirroring the PyTorch module.
    diff = output_1 - output_2 + PAIRWISE_EPS
    dist = jnp.sqrt(jnp.sum(diff * diff, axis=-1))
    loss_1 = label * dist ** 2
    loss_2 = (1.0 - label) * jnp.maximum(margin - dist, 0.0) ** 2
    return jnp.mean(loss_1 + loss_2)


if __name__ == "__main__":
    key = jax.random.PRNGKey(0)
    k1, k2, k3, k4, k5, k6, k7, k8, k9 = jax.random.split(key, 9)

    # Case 1: module-shaped toy inputs (B=8, D=32): fold=4, single full-extent tile.
    B, D = 8, 32
    o1 = jax.random.normal(k1, (B, D), dtype=jnp.float32)
    o2 = jax.random.normal(k2, (B, D), dtype=jnp.float32)
    lab = jax.random.bernoulli(k3, 0.5, (B,)).astype(jnp.float32)
    loss = jax.block_until_ready(contrastive_loss(o1, o2, lab))
    ref = _reference(o1, o2, lab)
    assert jnp.allclose(loss, ref, rtol=1e-5, atol=1e-5), (loss, ref)

    # Case 2: multi-tile grid with a ragged, in-kernel-masked last tile
    # (B=500, D=32, 128-row tiles -> 4 tiles of 32 folded rows; last has 29 valid).
    B2, D2 = 500, 32
    o1b = jax.random.normal(k4, (B2, D2), dtype=jnp.float32)
    o2b = jax.random.normal(k5, (B2, D2), dtype=jnp.float32)
    lab_b = jax.random.bernoulli(k6, 0.5, (B2,)).astype(jnp.float32)
    loss2 = jax.block_until_ready(contrastive_loss(o1b, o2b, lab_b, tile_rows=128))
    ref2 = _reference(o1b, o2b, lab_b)
    assert jnp.allclose(loss2, ref2, rtol=1e-5, atol=1e-5), (loss2, ref2)

    # Case 3: feature dim that does not divide 128 (fold=1 path), tiny batch.
    B3, D3 = 6, 48
    o1c = jax.random.normal(k7, (B3, D3), dtype=jnp.float32)
    o2c = jax.random.normal(k8, (B3, D3), dtype=jnp.float32)
    lab_c = jax.random.bernoulli(k9, 0.5, (B3,)).astype(jnp.float32)
    loss3 = jax.block_until_ready(contrastive_loss(o1c, o2c, lab_c))
    ref3 = _reference(o1c, o2c, lab_c)
    assert jnp.allclose(loss3, ref3, rtol=1e-5, atol=1e-5), (loss3, ref3)

    print("KERNEL_OK")
</pallas_src>

<mosaic_0001>
module attributes {stable_mosaic.version = 11 : i64} {
  func.func @_contrastive_loss_kernel(%arg0: i32, %arg1: memref<128x4xf32, #tpu.memory_space<vmem>>, %arg2: memref<2x128xf32, #tpu.memory_space<vmem>>, %arg3: memref<2x128xf32, #tpu.memory_space<vmem>>, %arg4: memref<2x4xf32, #tpu.memory_space<vmem>>, %arg5: memref<1x8x128xf32, #tpu.memory_space<vmem>>) attributes {dimension_semantics = [#tpu.dimension_semantics<parallel>], iteration_bounds = array<i64: 1>, scalar_prefetch = 0 : i64, scratch_operands = 0 : i64, tpu.core_type = #tpu.core_type<tc>, window_params = [{pipeline_mode = #tpu.pipeline_mode<synchronous>, transform_indices = @transform_0, window_bounds = array<i64: 128, 4>}, {transform_indices = @transform_1, window_bounds = array<i64: 2, 128>}, {transform_indices = @transform_2, window_bounds = array<i64: 2, 128>}, {transform_indices = @transform_3, window_bounds = array<i64: 2, 4>}, {transform_indices = @transform_4, window_bounds = array<i64: 1, 8, 128>}]} {
    %c0 = arith.constant 0 : index
    %c0_0 = arith.constant 0 : index
    %0 = vector.load %arg2[%c0, %c0_0] : memref<2x128xf32, #tpu.memory_space<vmem>>, vector<2x128xf32>
    %c0_1 = arith.constant 0 : index
    %c0_2 = arith.constant 0 : index
    %1 = vector.load %arg3[%c0_1, %c0_2] : memref<2x128xf32, #tpu.memory_space<vmem>>, vector<2x128xf32>
    %2 = arith.subf %0, %1 : vector<2x128xf32>
    %cst = arith.constant 9.99999997E-7 : f32
    %3 = vector.broadcast %cst : f32 to vector<2x128xf32>
    %4 = arith.addf %2, %3 : vector<2x128xf32>
    %5 = arith.mulf %4, %4 : vector<2x128xf32>
    %c0_3 = arith.constant 0 : index
    %c0_4 = arith.constant 0 : index
    %6 = vector.load %arg1[%c0_3, %c0_4] : memref<128x4xf32, #tpu.memory_space<vmem>>, vector<128x4xf32>
    %cst_5 = arith.constant dense<0.000000e+00> : vector<2x4xf32>
    %7 = tpu.matmul %5, %6, %cst_5 {dimension_numbers = #tpu.dot_dimension_numbers<[1], [0], [0], [1], [0, 0, 1, 1], [], []>} : vector<2x128xf32>, vector<128x4xf32>, vector<2x4xf32> -> vector<2x4xf32>
    %8 = math.sqrt %7 : vector<2x4xf32>
    %c0_6 = arith.constant 0 : index
    %c0_7 = arith.constant 0 : index
    %9 = vector.load %arg4[%c0_6, %c0_7] : memref<2x4xf32, #tpu.memory_space<vmem>>, vector<2x4xf32>
    %cst_8 = arith.constant 2.000000e+00 : f32
    %10 = vector.broadcast %cst_8 : f32 to vector<2x4xf32>
    %11 = arith.subf %10, %8 : vector<2x4xf32>
    %cst_9 = arith.constant 0.000000e+00 : f32
    %12 = vector.broadcast %cst_9 : f32 to vector<2x4xf32>
    %13 = arith.maximumf %11, %12 : vector<2x4xf32>
    %14 = arith.mulf %9, %7 : vector<2x4xf32>
    %cst_10 = arith.constant 1.000000e+00 : f32
    %15 = vector.broadcast %cst_10 : f32 to vector<2x4xf32>
    %16 = arith.subf %15, %9 : vector<2x4xf32>
    %17 = arith.mulf %13, %13 : vector<2x4xf32>
    %18 = arith.mulf %16, %17 : vector<2x4xf32>
    %19 = arith.addf %14, %18 : vector<2x4xf32>
    %20 = vector.shape_cast %19 : vector<2x4xf32> to vector<1x2x4xf32>
    %cst_11 = arith.constant dense<0.000000e+00> : vector<1xf32>
    %21 = vector.multi_reduction <add>, %20, %cst_11 [1, 2] : vector<1x2x4xf32> to vector<1xf32>
    %22 = vector.shape_cast %21 : vector<1xf32> to vector<1x1x1xf32>
    %23 = vector.extract %22[0, 0, 0] : f32 from vector<1x1x1xf32>
    %24 = vector.broadcast %23 : f32 to vector<1x8x128xf32>
    %c0_12 = arith.constant 0 : index
    %c0_13 = arith.constant 0 : index
    %c0_14 = arith.constant 0 : index
    %25 = vector.load %arg5[%c0_12, %c0_13, %c0_14] : memref<1x8x128xf32, #tpu.memory_space<vmem>>, vector<1x8x128xf32>
    tpu.vector_store %arg5[%c0_12, %c0_13, %c0_14], %24 {strides = array<i32>} : memref<1x8x128xf32, #tpu.memory_space<vmem>>, vector<1x8x128xf32>,
    return
  }
  func.func @transform_0(%arg0: i32) -> (i32, i32) {
    %c0_i32 = arith.constant 0 : i32
    %c0_i32_0 = arith.constant 0 : i32
    %c0_i32_1 = arith.constant 0 : i32
    return %c0_i32, %c0_i32_0 : i32, i32
  }
  func.func @transform_1(%arg0: i32) -> (i32, i32) {
    %c0_i32 = arith.constant 0 : i32
    %c0_i32_0 = arith.constant 0 : i32
    return %arg0, %c0_i32 : i32, i32
  }
  func.func @transform_2(%arg0: i32) -> (i32, i32) {
    %c0_i32 = arith.constant 0 : i32
    %c0_i32_0 = arith.constant 0 : i32
    return %arg0, %c0_i32 : i32, i32
  }
  func.func @transform_3(%arg0: i32) -> (i32, i32) {
    %c0_i32 = arith.constant 0 : i32
    %c0_i32_0 = arith.constant 0 : i32
    return %arg0, %c0_i32 : i32, i32
  }
  func.func @transform_4(%arg0: i32) -> (i32, i32, i32) {
    %c0_i32 = arith.constant 0 : i32
    %c0_i32_0 = arith.constant 0 : i32
    %c0_i32_1 = arith.constant 0 : i32
    return %arg0, %c0_i32, %c0_i32_0 : i32, i32, i32
  }
}

</mosaic_0001>

<llo_original>
// kernel: tpu_custom_call.1
$region0: #{tpu_custom_call.1}
  #allocation0 [shape = 'u32[]', space=smem, size = 0x4, offset = 0x4, fixed_abs, tag = 'smem constant byte address 0x4 - core index']
  #allocation1 [shape = 'u32[144,128]{1,0:T(1,128)}', space=vmem, size = 0x12000, scoped, tag = 'internal scratch']
  %s0 = inlined_call_operand.vmem [shape: f32[128,4], index: 0, kind: input, shape index: {}]
  %s1 = inlined_call_operand.vmem [shape: f32[2,128], index: 1, kind: input, shape index: {}]
  %s2 = inlined_call_operand.vmem [shape: f32[2,128], index: 2, kind: input, shape index: {}]
  %s3 = inlined_call_operand.vmem [shape: f32[2,4], index: 3, kind: input, shape index: {}]
  %s4 = inlined_call_operand.hbm [shape: f32[1,8,128], index: 4, kind: output, shape index: {}]
  %s5 = sld [smem:[#allocation0]]
  $region26: #{tpu_custom_call.1} parent=0
    _
  %s7 = ssub.s32 1, %s5
  %s8 = scalar_select 0, %s7, %s5
  $region1: #{tpu_custom_call.1} parent=0
    #allocation2 [shape = 'u8[4096]{0}', space=vmem, size = 0x1000, scoped, tag = 'output window, operand 0, single buffered']
    #allocation3 [shape = 's32[1]{0}', space=sflag, size = 0x4, scoped, tag = 'scoped memory for tpu_custom_call.1']
    %9 = vsyncpa [#allocation3], 0
    // Predicated region
    $region2: #{tpu_custom_call.1} parent=1 // pred_check
      _
    $region3: #{tpu_custom_call.1} parent=1 // pred_check_branch
      %11 = sbr.rel (0) target = $region5
    $region4: #{tpu_custom_call.1} parent=1 // pred_region
      _
    $region5: #{tpu_custom_call.1} parent=1 // pred_fallthru
      _
    // Predicated region
    $region6: #{tpu_custom_call.1} parent=1 // pred_check
      _
    $region7: #{tpu_custom_call.1} parent=1 // pred_check_branch
      %13 = sbr.rel (0) target = $region9
    $region8: #{tpu_custom_call.1} parent=1 // pred_region
      _
    $region9: #{tpu_custom_call.1} parent=1 // pred_fallthru
      _
    // Predicated region
    $region10: #{tpu_custom_call.1} parent=1 // pred_check
      _
    $region11: #{tpu_custom_call.1} parent=1 // pred_check_branch
      %15 = sbr.rel (0) target = $region13
    $region12: #{tpu_custom_call.1} parent=1 // pred_region
      _
    $region13: #{tpu_custom_call.1} parent=1 // pred_fallthru
      _
    // Predicated region
    $region14: #{tpu_custom_call.1} parent=1 // pred_check
      _
    $region15: #{tpu_custom_call.1} parent=1 // pred_check_branch
      %17 = sbr.rel (0) target = $region17
    $region16: #{tpu_custom_call.1} parent=1 // pred_region
      _
    $region17: #{tpu_custom_call.1} parent=1 // pred_fallthru
      _
    %v18 = vld [vmem:[%s1] sm:$0x3]
    %v19 = vld [vmem:[%s2] sm:$0x3]
    %v20 = vsub.f32 %v18, %v19
    %v21 = vadd.f32 %v20, 1e-06
    %v22 = vmul.f32 %v21, %v21
    %v23 = vld [vmem:[%s0] sm:$0xff]
    %v24 = vld [vmem:[%s0 + $0x8] sm:$0xff]
    %v25 = vld [vmem:[%s0 + $0x10] sm:$0xff]
    %v26 = vld [vmem:[%s0 + $0x18] sm:$0xff]
    %v27 = vld [vmem:[%s0 + $0x20] sm:$0xff]
    %v28 = vld [vmem:[%s0 + $0x28] sm:$0xff]
    %v29 = vld [vmem:[%s0 + $0x30] sm:$0xff]
    %v30 = vld [vmem:[%s0 + $0x38] sm:$0xff]
    %v31 = vld [vmem:[%s0 + $0x40] sm:$0xff]
    %v32 = vld [vmem:[%s0 + $0x48] sm:$0xff]
    %v33 = vld [vmem:[%s0 + $0x50] sm:$0xff]
    %v34 = vld [vmem:[%s0 + $0x58] sm:$0xff]
    %v35 = vld [vmem:[%s0 + $0x60] sm:$0xff]
    %v36 = vld [vmem:[%s0 + $0x68] sm:$0xff]
    %v37 = vld [vmem:[%s0 + $0x70] sm:$0xff]
    %v38 = vld [vmem:[%s0 + $0x78] sm:$0xff]
    %39 = vmatprep.subr.mxu0 0.0
    %40 = vmatpush1.msra.mxu0 %v23
    %41 = vmatprep.subr.mxu0 0.0
    %42 = vmatpush1.msra.mxu0 %v24
    %43 = vmatprep.subr.mxu0 0.0
    %44 = vmatpush1.msra.mxu0 %v25
    %45 = vmatprep.subr.mxu0 0.0
    %46 = vmatpush1.msra.mxu0 %v26
    %47 = vmatprep.subr.mxu0 0.0
    %48 = vmatpush1.msra.mxu0 %v27
    %49 = vmatprep.subr.mxu0 0.0
    %50 = vmatpush1.msra.mxu0 %v28
    %51 = vmatprep.subr.mxu0 0.0
    %52 = vmatpush1.msra.mxu0 %v29
    %53 = vmatprep.subr.mxu0 0.0
    %54 = vmatpush1.msra.mxu0 %v30
    %55 = vmatprep.subr.mxu0 0.0
    %56 = vmatpush1.msra.mxu0 %v31
    %57 = vmatprep.subr.mxu0 0.0
    %58 = vmatpush1.msra.mxu0 %v32
    %59 = vmatprep.subr.mxu0 0.0
    %60 = vmatpush1.msra.mxu0 %v33
    %61 = vmatprep.subr.mxu0 0.0
    %62 = vmatpush1.msra.mxu0 %v34
    %63 = vmatprep.subr.mxu0 0.0
    %64 = vmatpush1.msra.mxu0 %v35
    %65 = vmatprep.subr.mxu0 0.0
    %66 = vmatpush1.msra.mxu0 %v36
    %67 = vmatprep.subr.mxu0 0.0
    %68 = vmatpush1.msra.mxu0 %v37
    %69 = vmatprep.subr.mxu0 0.0
    %70 = vmatpush1.msra.mxu0 %v38
    %71 = vmatprep.subr.mxu0 0.0
    %72 = vmatpush1.msra.mxu0 0.0
    %73 = vmatprep.subr.mxu0 0.0
    %74 = vmatpush1.msra.mxu0 0.0
    %75 = vmatprep.subr.mxu0 0.0
    %76 = vmatpush1.msra.mxu0 0.0
    %77 = vmatprep.subr.mxu0 0.0
    %78 = vmatpush1.msra.mxu0 0.0
    %79 = vmatprep.subr.mxu0 0.0
    %80 = vmatpush1.msra.mxu0 0.0
    %81 = vmatprep.subr.mxu0 0.0
    %82 = vmatpush1.msra.mxu0 0.0
    %83 = vmatprep.subr.mxu0 0.0
    %84 = vmatpush1.msra.mxu0 0.0
    %85 = vmatprep.subr.mxu0 0.0
    %86 = vmatpush1.msra.mxu0 0.0
    %87 = vmatprep.subr.mxu0 0.0
    %88 = vmatpush1.msra.mxu0 0.0
    %89 = vmatprep.subr.mxu0 0.0
    %90 = vmatpush1.msra.mxu0 0.0
    %91 = vmatprep.subr.mxu0 0.0
    %92 = vmatpush1.msra.mxu0 0.0
    %93 = vmatprep.subr.mxu0 0.0
    %94 = vmatpush1.msra.mxu0 0.0
    %95 = vmatprep.subr.mxu0 0.0
    %96 = vmatpush1.msra.mxu0 0.0
    %97 = vmatprep.subr.mxu0 0.0
    %98 = vmatpush1.msra.mxu0 0.0
    %99 = vmatprep.subr.mxu0 0.0
    %100 = vmatpush1.msra.mxu0 0.0
    %101 = vmatprep.subr.mxu0 0.0
    %102 = vmatpush1.msra.mxu0 0.0
    %103 = vmatprep.mubr.f32.mxu0 0.0
    %104 = vmatmul.mubr.f32.gmra.mrb[0].mxu0 %v22
    %v105 = vpop.f32.mrb[0].mxu0
    %v106 = vadd.f32 0.0, %v105
    %v107 = vpop.f32.mrb[0].mxu0
    %108 = vdwg.mxu0
    %v109 = vrsqrt.pop %v106
    %v110 = vmul.f32 %v106, %v109
    %vm111 = vcmp.eq.f32.partialorder %v106, inf
    %v112 = vsel %vm111, %v106, %v110
    %vm113 = vcmp.eq.f32.partialorder %v106, 0.0
    %v114 = vand.u32 %v106, 2147483648
    %v115 = vsel %vm113, %v114, %v112
    %v116 = vld [vmem:[%s3] sm:$0x3]
    %v117 = vsub.f32 2.0, %v115
    %v118 = vmax.f32 %v117, 0.0
    %v119 = vmul.f32 %v116, %v106
    %v120 = vsub.f32 1.0, %v116
    %v121 = vmul.f32 %v118, %v118
    %v122 = vmul.f32 %v120, %v121
    %v123 = vadd.f32 %v119, %v122
    %vm124 = vcmask 25600
    %v125 = vsel %vm124, %v123, 0.0
    %126 = vadd.xlane.f32.xlu0 %v125
    %v127 = vpop.xlane.xlu0 %126
    %v128 = vrot.slane %v127, 4
    %v129 = vadd.f32 %v127, %v128
    %v130 = vrot.slane %v129, 2
    %v131 = vadd.f32 %v129, %v130
    %v132 = vrot.slane %v131, 1
    %v133 = vadd.f32 %v131, %v132
    %s134 = vtos %v133
    %v135 = vstv %s134
    %136 = vst [vmem:[#allocation2] sm:$0xff] %v135
    // Predicated region
    $region18: #{tpu_custom_call.1} parent=1 // pred_check
      _
    $region19: #{tpu_custom_call.1} parent=1 // pred_check_branch
      %138 = sbr.rel (0) target = $region21
    $region20: #{tpu_custom_call.1} parent=1 // pred_region
      %s140 = ssub.s32 128, 128
      %141 = vsyncadd [#allocation3], %s140
      %s143 = sshll.u32 [#allocation2], 4
      %s144 = int_to_ptr.vmem [resolvable:$true] %s143
      %146 = dma.vmem_to_hbm [thread:$0]  %s144, 128, %s4, [#allocation3]
    $region21: #{tpu_custom_call.1} parent=1 // pred_fallthru
      _
    // Predicated region
    $region22: #{tpu_custom_call.1} parent=1 // pred_check
      _
    $region23: #{tpu_custom_call.1} parent=1 // pred_check_branch
      %148 = sbr.rel (0) target = $region25
    $region24: #{tpu_custom_call.1} parent=1 // pred_region
      %149 = dma.done [#allocation3], 128
    $region25: #{tpu_custom_call.1} parent=1 // pred_fallthru
      _
    %150 = vsyncpa [#allocation3], 1

</llo_original>
